<compile_context>
chip_gen: v7x
topology: tpu7x:2x2x1
jax: 0.10.0
libtpu: 0.0.40
codegen_flags: <defaults>
</compile_context>

<pallas_src>
import jax
import jax.numpy as jnp
from jax.experimental import pallas as pl
from jax.experimental.pallas import tpu as pltpu

IN_FEATURES = 64
OUT_FEATURES = 64
MAX_TB = 4096          # upper bound on batch-tile rows per grid step

# TODO(synk): the original module calls torch.clamp_max(v1, min) /
# torch.clamp_min(..., max) with the undefined Python builtins `min`/`max`
# (this is the jit_fail case). We substitute deterministic scalar bounds and
# preserve the op order (clamp_max first, then clamp_min).
CLAMP_MAX_ARG = 0.5    # upper bound applied by clamp_max
CLAMP_MIN_ARG = -0.5   # lower bound applied by clamp_min


def linear_clamp_kernel(x_ref, w_ref, b_ref, o_ref):
    # x_ref: (TB, IN)   w_ref: (IN, OUT)   b_ref: (1, OUT)   o_ref: (TB, OUT)
    y = jnp.dot(x_ref[...], w_ref[...], preferred_element_type=jnp.float32)
    y = y + b_ref[...]
    y = jnp.minimum(y, CLAMP_MAX_ARG)   # torch.clamp_max(v1, ...)
    y = jnp.maximum(y, CLAMP_MIN_ARG)   # torch.clamp_min(..., ...)
    o_ref[...] = y.astype(o_ref.dtype)


def prepare_params(weight, bias):
    """One-time (init-time) layout prep.

    weight: [out=64, in=64] (PyTorch Linear layout)  ->  [in=64, out=64]
    bias:   [64]                                     ->  [1, 64]
    """
    w_t = jnp.transpose(weight)                 # [IN, OUT]
    b_2d = bias.reshape(1, OUT_FEATURES)        # [1, OUT]
    return w_t, b_2d


def _round_up(x, m):
    return ((x + m - 1) // m) * m


def _choose_tb(B):
    """Pick a batch tile: big enough to amortize per-step overhead, but with
    >= 2 grid steps when the batch is large (so both v7x TensorCores work)."""
    if B <= 8:
        return B                                 # single full-array block
    half = _round_up(pl.cdiv(B, 2), 8)           # at least two grid steps
    return min(MAX_TB, half)


def model_forward(x, w_t, b_2d):
    """x: [B, 64], w_t: [64, 64], b_2d: [1, 64] -> [B, 64]."""
    B = x.shape[0]
    TB = _choose_tb(B)
    grid = (pl.cdiv(B, TB),)

    # Real HBM traffic: read x, weight, bias; write output.
    bytes_accessed = 4 * (B * IN_FEATURES
                          + IN_FEATURES * OUT_FEATURES
                          + OUT_FEATURES
                          + B * OUT_FEATURES)

    # Per-step VMEM footprint (double-buffered x/out blocks + resident params),
    # with ~2x headroom; keeps the scoped-VMEM reservation honest.
    per_step_bytes = 4 * (2 * TB * IN_FEATURES
                          + 2 * TB * OUT_FEATURES
                          + IN_FEATURES * OUT_FEATURES
                          + OUT_FEATURES)
    vmem_limit = max(2 * 1024 * 1024, 2 * per_step_bytes)

    return pl.pallas_call(
        linear_clamp_kernel,
        out_shape=jax.ShapeDtypeStruct((B, OUT_FEATURES), x.dtype),
        grid=grid,
        in_specs=[
            # batch-tiled activations
            pl.BlockSpec((TB, IN_FEATURES), lambda i: (i, 0)),
            # weight / bias stay resident across all grid steps
            pl.BlockSpec((IN_FEATURES, OUT_FEATURES), lambda i: (0, 0)),
            pl.BlockSpec((1, OUT_FEATURES), lambda i: (0, 0)),
        ],
        out_specs=pl.BlockSpec((TB, OUT_FEATURES), lambda i: (i, 0)),
        compiler_params=pltpu.CompilerParams(
            dimension_semantics=("parallel",),
            vmem_limit_bytes=vmem_limit,
        ),
        cost_estimate=pl.CostEstimate(
            flops=2 * B * IN_FEATURES * OUT_FEATURES,
            bytes_accessed=bytes_accessed,
            transcendentals=0,
        ),
    )(x, w_t, b_2d)


def _reference(x, weight, bias):
    # Pure-JAX reference of the original forward (with substituted bounds).
    return jnp.maximum(jnp.minimum(x @ weight.T + bias, CLAMP_MAX_ARG),
                       CLAMP_MIN_ARG)


if __name__ == "__main__":
    key = jax.random.PRNGKey(0)
    k_x, k_w, k_b, k_x2 = jax.random.split(key, 4)

    # Deterministic parameter init mimicking torch.nn.Linear default:
    # U(-1/sqrt(in_features), 1/sqrt(in_features))
    bound = 1.0 / (IN_FEATURES ** 0.5)
    weight = jax.random.uniform(
        k_w, (OUT_FEATURES, IN_FEATURES), minval=-bound, maxval=bound,
        dtype=jnp.float32)
    bias = jax.random.uniform(
        k_b, (OUT_FEATURES,), minval=-bound, maxval=bound, dtype=jnp.float32)

    # One-time parameter prep (outside the per-call path).
    w_t, b_2d = prepare_params(weight, bias)

    # Primary case: input matches the module's expected shape (1, 64).
    x = jax.random.normal(k_x, (1, IN_FEATURES), dtype=jnp.float32)
    out = model_forward(x, w_t, b_2d)
    jax.block_until_ready(out)
    assert out.shape == (1, OUT_FEATURES), "bad output shape"
    assert jnp.allclose(out, _reference(x, weight, bias), atol=1e-5), \
        "mismatch vs reference (B=1)"

    # Secondary check: batch not divisible by the tile (exercises the
    # partial last block / masked writeback path).
    x2 = jax.random.normal(k_x2, (20, IN_FEATURES), dtype=jnp.float32)
    out2 = model_forward(x2, w_t, b_2d)
    jax.block_until_ready(out2)
    assert out2.shape == (20, OUT_FEATURES), "bad output shape (B=20)"
    assert jnp.allclose(out2, _reference(x2, weight, bias), atol=1e-5), \
        "mismatch vs reference (B=20)"

    print("KERNEL_OK")
</pallas_src>

<mosaic_0001>
module attributes {stable_mosaic.version = 11 : i64} {
  func.func @linear_clamp_kernel(%arg0: i32, %arg1: memref<1x64xf32, #tpu.memory_space<vmem>>, %arg2: memref<64x64xf32, #tpu.memory_space<vmem>>, %arg3: memref<1x64xf32, #tpu.memory_space<vmem>>, %arg4: memref<1x64xf32, #tpu.memory_space<vmem>>) attributes {dimension_semantics = [#tpu.dimension_semantics<parallel>], iteration_bounds = array<i64: 1>, scalar_prefetch = 0 : i64, scratch_operands = 0 : i64, tpu.core_type = #tpu.core_type<tc>, window_params = [{transform_indices = @transform_0, window_bounds = array<i64: 1, 64>}, {pipeline_mode = #tpu.pipeline_mode<synchronous>, transform_indices = @transform_1, window_bounds = array<i64: 64, 64>}, {pipeline_mode = #tpu.pipeline_mode<synchronous>, transform_indices = @transform_2, window_bounds = array<i64: 1, 64>}, {transform_indices = @transform_3, window_bounds = array<i64: 1, 64>}]} {
    %c0 = arith.constant 0 : index
    %c0_0 = arith.constant 0 : index
    %0 = vector.load %arg1[%c0, %c0_0] : memref<1x64xf32, #tpu.memory_space<vmem>>, vector<1x64xf32>
    %c0_1 = arith.constant 0 : index
    %c0_2 = arith.constant 0 : index
    %1 = vector.load %arg2[%c0_1, %c0_2] : memref<64x64xf32, #tpu.memory_space<vmem>>, vector<64x64xf32>
    %cst = arith.constant dense<0.000000e+00> : vector<1x64xf32>
    %2 = tpu.matmul %0, %1, %cst {dimension_numbers = #tpu.dot_dimension_numbers<[1], [0], [0], [1], [0, 0, 1, 1], [], []>} : vector<1x64xf32>, vector<64x64xf32>, vector<1x64xf32> -> vector<1x64xf32>
    %c0_3 = arith.constant 0 : index
    %c0_4 = arith.constant 0 : index
    %3 = vector.load %arg3[%c0_3, %c0_4] : memref<1x64xf32, #tpu.memory_space<vmem>>, vector<1x64xf32>
    %4 = arith.addf %2, %3 : vector<1x64xf32>
    %cst_5 = arith.constant 5.000000e-01 : f32
    %5 = vector.broadcast %cst_5 : f32 to vector<1x64xf32>
    %6 = arith.minimumf %4, %5 : vector<1x64xf32>
    %cst_6 = arith.constant -5.000000e-01 : f32
    %7 = vector.broadcast %cst_6 : f32 to vector<1x64xf32>
    %8 = arith.maximumf %6, %7 : vector<1x64xf32>
    %c0_7 = arith.constant 0 : index
    %c0_8 = arith.constant 0 : index
    %9 = vector.load %arg4[%c0_7, %c0_8] : memref<1x64xf32, #tpu.memory_space<vmem>>, vector<1x64xf32>
    tpu.vector_store %arg4[%c0_7, %c0_8], %8 {strides = array<i32>} : memref<1x64xf32, #tpu.memory_space<vmem>>, vector<1x64xf32>,
    return
  }
  func.func @transform_0(%arg0: i32) -> (i32, i32) {
    %c0_i32 = arith.constant 0 : i32
    %c0_i32_0 = arith.constant 0 : i32
    return %arg0, %c0_i32 : i32, i32
  }
  func.func @transform_1(%arg0: i32) -> (i32, i32) {
    %c0_i32 = arith.constant 0 : i32
    %c0_i32_0 = arith.constant 0 : i32
    %c0_i32_1 = arith.constant 0 : i32
    return %c0_i32, %c0_i32_0 : i32, i32
  }
  func.func @transform_2(%arg0: i32) -> (i32, i32) {
    %c0_i32 = arith.constant 0 : i32
    %c0_i32_0 = arith.constant 0 : i32
    %c0_i32_1 = arith.constant 0 : i32
    return %c0_i32, %c0_i32_0 : i32, i32
  }
  func.func @transform_3(%arg0: i32) -> (i32, i32) {
    %c0_i32 = arith.constant 0 : i32
    %c0_i32_0 = arith.constant 0 : i32
    return %arg0, %c0_i32 : i32, i32
  }
}

</mosaic_0001>

<llo_original>
// kernel: tpu_custom_call.1
$region0: #{tpu_custom_call.1}
  #allocation0 [shape = 'u32[]', space=smem, size = 0x4, offset = 0x4, fixed_abs, tag = 'smem constant byte address 0x4 - core index']
  #allocation1 [shape = 'u32[144,128]{1,0:T(1,128)}', space=vmem, size = 0x12000, scoped, tag = 'internal scratch']
  %s0 = inlined_call_operand.hbm [shape: f32[1,64], index: 0, kind: input, shape index: {}]
  %s1 = inlined_call_operand.hbm [shape: f32[64,64], index: 1, kind: input, shape index: {}]
  %s2 = inlined_call_operand.vmem [shape: f32[1,64], index: 2, kind: input, shape index: {}]
  %s3 = inlined_call_operand.hbm [shape: f32[1,64], index: 3, kind: output, shape index: {}]
  %s4 = sld [smem:[#allocation0]]
  $region30: #{tpu_custom_call.1} parent=0
    _
  %s6 = ssub.s32 1, %s4
  %s7 = scalar_select 0, %s6, %s4
  $region1: #{tpu_custom_call.1} parent=0
    #allocation2 [shape = 'u8[512]{0}', space=vmem, size = 0x400, scoped, tag = 'input window, operand 0, single buffered']
    #allocation3 [shape = 's32[1]{0}', space=sflag, size = 0x4, scoped, tag = 'scoped memory for tpu_custom_call.1']
    #allocation4 [shape = 's32[1]{0}', space=sflag, size = 0x4, scoped, tag = 'scoped memory for tpu_custom_call.1']
    #allocation5 [shape = 'u8[32768]{0}', space=vmem, size = 0x8000, scoped, tag = 'input window, operand 1, single buffered']
    #allocation6 [shape = 's32[1]{0}', space=sflag, size = 0x4, scoped, tag = 'scoped memory for tpu_custom_call.1']
    #allocation7 [shape = 'u8[512]{0}', space=vmem, size = 0x400, scoped, tag = 'output window, operand 0, single buffered']
    %8 = vsyncpa [#allocation3], 0
    %9 = vsyncpa [#allocation6], 0
    %10 = vsyncpa [#allocation4], 0
    // Predicated region
    $region2: #{tpu_custom_call.1} parent=1 // pred_check
      _
    $region3: #{tpu_custom_call.1} parent=1 // pred_check_branch
      %12 = sbr.rel (0) target = $region5
    $region4: #{tpu_custom_call.1} parent=1 // pred_region
      %s14 = ssub.s32 16, 16
      %15 = vsyncadd [#allocation3], %s14
      %s17 = sshll.u32 [#allocation2], 4
      %s18 = int_to_ptr.vmem [resolvable:$true] %s17
      %20 = dma.hbm_to_vmem [thread:$0]  %s0, 16, %s18, [#allocation3]
    $region5: #{tpu_custom_call.1} parent=1 // pred_fallthru
      _
    // Predicated region
    $region6: #{tpu_custom_call.1} parent=1 // pred_check
      _
    $region7: #{tpu_custom_call.1} parent=1 // pred_check_branch
      %22 = sbr.rel (0) target = $region9
    $region8: #{tpu_custom_call.1} parent=1 // pred_region
      %s24 = ssub.s32 1024, 1024
      %25 = vsyncadd [#allocation6], %s24
      %s26 = sshll.u32 [#allocation5], 4
      %s27 = int_to_ptr.vmem [resolvable:$true] %s26
      %32 = dma.hbm_to_vmem [thread:$0]  %s1, 1024, %s27, [#allocation6], 128, 128, 8
    $region9: #{tpu_custom_call.1} parent=1 // pred_fallthru
      _
    // Predicated region
    $region10: #{tpu_custom_call.1} parent=1 // pred_check
      _
    $region11: #{tpu_custom_call.1} parent=1 // pred_check_branch
      %34 = sbr.rel (0) target = $region13
    $region12: #{tpu_custom_call.1} parent=1 // pred_region
      _
    $region13: #{tpu_custom_call.1} parent=1 // pred_fallthru
      _
    // Predicated region
    $region14: #{tpu_custom_call.1} parent=1 // pred_check
      _
    $region15: #{tpu_custom_call.1} parent=1 // pred_check_branch
      %36 = sbr.rel (0) target = $region17
    $region16: #{tpu_custom_call.1} parent=1 // pred_region
      %37 = dma.done [#allocation3], 16
    $region17: #{tpu_custom_call.1} parent=1 // pred_fallthru
      _
    // Predicated region
    $region18: #{tpu_custom_call.1} parent=1 // pred_check
      _
    $region19: #{tpu_custom_call.1} parent=1 // pred_check_branch
      %39 = sbr.rel (0) target = $region21
    $region20: #{tpu_custom_call.1} parent=1 // pred_region
      %40 = dma.done [#allocation6], 1024
    $region21: #{tpu_custom_call.1} parent=1 // pred_fallthru
      _
    %v41 = vld [vmem:[#allocation2] sm:$0x1]
    %v42 = vld [vmem:[#allocation5] sm:$0xff]
    %v43 = vld [vmem:[#allocation5 + $0x8] sm:$0xff]
    %v44 = vld [vmem:[#allocation5 + $0x10] sm:$0xff]
    %v45 = vld [vmem:[#allocation5 + $0x18] sm:$0xff]
    %v46 = vld [vmem:[#allocation5 + $0x20] sm:$0xff]
    %v47 = vld [vmem:[#allocation5 + $0x28] sm:$0xff]
    %v48 = vld [vmem:[#allocation5 + $0x30] sm:$0xff]
    %v49 = vld [vmem:[#allocation5 + $0x38] sm:$0xff]
    %v50 = vld [vmem:[%s2] sm:$0x1]
    %vm51 = vcmask 523264
    %v53 = vsel %vm51, %v41, 0
    %55 = vmatprep.subr.mxu0 0.0
    %56 = vmatpush1.msra.mxu0 %v42
    %57 = vmatprep.subr.mxu0 0.0
    %58 = vmatpush1.msra.mxu0 %v43
    %59 = vmatprep.subr.mxu0 0.0
    %60 = vmatpush1.msra.mxu0 %v44
    %61 = vmatprep.subr.mxu0 0.0
    %62 = vmatpush1.msra.mxu0 %v45
    %63 = vmatprep.subr.mxu0 0.0
    %64 = vmatpush1.msra.mxu0 %v46
    %65 = vmatprep.subr.mxu0 0.0
    %66 = vmatpush1.msra.mxu0 %v47
    %67 = vmatprep.subr.mxu0 0.0
    %68 = vmatpush1.msra.mxu0 %v48
    %69 = vmatprep.subr.mxu0 0.0
    %70 = vmatpush1.msra.mxu0 %v49
    %71 = vmatprep.subr.mxu0 0.0
    %72 = vmatpush1.msra.mxu0 0.0
    %73 = vmatprep.subr.mxu0 0.0
    %74 = vmatpush1.msra.mxu0 0.0
    %75 = vmatprep.subr.mxu0 0.0
    %76 = vmatpush1.msra.mxu0 0.0
    %77 = vmatprep.subr.mxu0 0.0
    %78 = vmatpush1.msra.mxu0 0.0
    %79 = vmatprep.subr.mxu0 0.0
    %80 = vmatpush1.msra.mxu0 0.0
    %81 = vmatprep.subr.mxu0 0.0
    %82 = vmatpush1.msra.mxu0 0.0
    %83 = vmatprep.subr.mxu0 0.0
    %84 = vmatpush1.msra.mxu0 0.0
    %85 = vmatprep.subr.mxu0 0.0
    %86 = vmatpush1.msra.mxu0 0.0
    %87 = vmatprep.subr.mxu0 0.0
    %88 = vmatpush1.msra.mxu0 0.0
    %89 = vmatprep.subr.mxu0 0.0
    %90 = vmatpush1.msra.mxu0 0.0
    %91 = vmatprep.subr.mxu0 0.0
    %92 = vmatpush1.msra.mxu0 0.0
    %93 = vmatprep.subr.mxu0 0.0
    %94 = vmatpush1.msra.mxu0 0.0
    %95 = vmatprep.subr.mxu0 0.0
    %96 = vmatpush1.msra.mxu0 0.0
    %97 = vmatprep.subr.mxu0 0.0
    %98 = vmatpush1.msra.mxu0 0.0
    %99 = vmatprep.subr.mxu0 0.0
    %100 = vmatpush1.msra.mxu0 0.0
    %101 = vmatprep.subr.mxu0 0.0
    %102 = vmatpush1.msra.mxu0 0.0
    %103 = vmatprep.subr.mxu0 0.0
    %104 = vmatpush1.msra.mxu0 0.0
    %105 = vmatprep.subr.mxu0 0.0
    %106 = vmatpush1.msra.mxu0 0.0
    %107 = vmatprep.subr.mxu0 0.0
    %108 = vmatpush1.msra.mxu0 0.0
    %109 = vmatprep.subr.mxu0 0.0
    %110 = vmatpush1.msra.mxu0 0.0
    %111 = vmatprep.subr.mxu0 0.0
    %112 = vmatpush1.msra.mxu0 0.0
    %113 = vmatprep.subr.mxu0 0.0
    %114 = vmatpush1.msra.mxu0 0.0
    %115 = vmatprep.subr.mxu0 0.0
    %116 = vmatpush1.msra.mxu0 0.0
    %117 = vmatprep.subr.mxu0 0.0
    %118 = vmatpush1.msra.mxu0 0.0
    %119 = vmatprep.mubr.f32.mxu0 0.0
    %120 = vmatmul.mubr.f32.gmra.mrb[0].mxu0 %v53
    %v121 = vpop.f32.mrb[0].mxu0
    %v122 = vadd.f32 %v50, %v121
    %v123 = vpop.f32.mrb[0].mxu0
    %124 = vdwg.mxu0
    %v125 = vmin.f32 %v122, 0.5
    %v126 = vmax.f32 %v125, -0.5
    %vm127 = vcmask 516096
    %128 = vst.msk [vmem:[#allocation7] sm:$0x1] %vm127, %v126
    // Predicated region
    $region22: #{tpu_custom_call.1} parent=1 // pred_check
      _
    $region23: #{tpu_custom_call.1} parent=1 // pred_check_branch
      %130 = sbr.rel (0) target = $region25
    $region24: #{tpu_custom_call.1} parent=1 // pred_region
      %s132 = ssub.s32 16, 16
      %133 = vsyncadd [#allocation4], %s132
      %s135 = sshll.u32 [#allocation7], 4
      %s136 = int_to_ptr.vmem [resolvable:$true] %s135
      %138 = dma.vmem_to_hbm [thread:$0]  %s136, 16, %s3, [#allocation4]
    $region25: #{tpu_custom_call.1} parent=1 // pred_fallthru
      _
    // Predicated region
    $region26: #{tpu_custom_call.1} parent=1 // pred_check
      _
    $region27: #{tpu_custom_call.1} parent=1 // pred_check_branch
      %140 = sbr.rel (0) target = $region29
    $region28: #{tpu_custom_call.1} parent=1 // pred_region
      %141 = dma.done [#allocation4], 16
    $region29: #{tpu_custom_call.1} parent=1 // pred_fallthru
      _
    %142 = vsyncpa [#allocation3], 1
    %143 = vsyncpa [#allocation6], 1
    %144 = vsyncpa [#allocation4], 1

</llo_original>
